<compile_context>
chip_gen: v5e
topology: v5e:2x2
jax: 0.10.0
libtpu: 0.0.40
codegen_flags: <defaults>
</compile_context>

<pallas_src>
import functools

import jax
import jax.numpy as jnp
from jax.experimental import pallas as pl
from jax.experimental.pallas import tpu as pltpu

_LANES = 128


def _vmem_capacity_bytes():
    """Physical VMEM per TensorCore (chip-aware, with a conservative fallback)."""
    try:
        cap = getattr(pltpu.get_tpu_info(), "vmem_capacity_bytes", None)
        if cap:
            return int(cap)
    except Exception:
        pass
    return 64 << 20  # v7x per-TC VMEM (v5e/v6e have 128 MiB)


def _pick_lane_tile(hw, bytes_per_lane, budget_bytes, max_tile=2048):
    """Largest lane tile (multiple of 128, <= max_tile) whose per-pass working
    set fits `budget_bytes`; never larger than HW rounded up to 128."""
    cap = budget_bytes // max(bytes_per_lane, 1)
    cap = max(_LANES, (cap // _LANES) * _LANES)
    cap = min(cap, max_tile)
    hw_ceil = ((hw + _LANES - 1) // _LANES) * _LANES
    return int(min(cap, hw_ceil))


def _vmem_limit(working_set_bytes, capacity_bytes):
    """Exact-ish VMEM limit: working set + slack, capped below physical VMEM."""
    lim = max(int(working_set_bytes) + (8 << 20), 32 << 20)
    return int(min(lim, (capacity_bytes * 9) // 10))


# ---------------------------------------------------------------------------
# Kernel 1: lane-wide per-(N, C) partial sum / sum-of-squares.
# ---------------------------------------------------------------------------
def _stats_kernel(x_ref, sum_ref, sq_ref, *, tn, hw, needs_mask):
    k = pl.program_id(1)

    @pl.when(k == 0)
    def _():
        sum_ref[...] = jnp.zeros_like(sum_ref)
        sq_ref[...] = jnp.zeros_like(sq_ref)

    s = jnp.zeros(sum_ref.shape, jnp.float32)
    q = jnp.zeros(sq_ref.shape, jnp.float32)
    for j in range(tn // _LANES):                       # lane-parallel VPU adds
        lo, hi = j * _LANES, (j + 1) * _LANES
        xj = x_ref[:, :, lo:hi].astype(jnp.float32)     # (1, C, 128)
        if needs_mask:
            lane = jax.lax.broadcasted_iota(jnp.int32, xj.shape, 2)
            xj = jnp.where(k * tn + lo + lane < hw, xj, 0.0)   # zero ragged tail
        s = s + xj
        q = q + xj * xj
    sum_ref[...] += s
    sq_ref[...] += q


# ---------------------------------------------------------------------------
# Kernel 2: y = leaky_relu(x * scale + shift)   (all renorm math pre-folded)
# ---------------------------------------------------------------------------
def _norm_act_kernel(x_ref, scale_ref, shift_ref, o_ref, *, slope):
    y = x_ref[...].astype(jnp.float32) * scale_ref[...] + shift_ref[...]
    o_ref[...] = jnp.where(y >= 0.0, y, slope * y).astype(o_ref.dtype)


@functools.partial(jax.jit, static_argnames=("eps", "activation_param"),
                   donate_argnums=(0,))
def inplace_abr_forward(x, weight, bias, running_mean, running_var,
                        eps=1e-5, activation_param=0.01):
    """InPlaceABR forward (training mode, renorm=True, momentum=0), x is NCHW."""
    N, C, H, W = x.shape
    HW = H * W
    M = N * HW
    itemsize = jnp.dtype(x.dtype).itemsize
    f32 = jnp.float32

    x3 = x.reshape(N, C, HW)                   # free reshape, no HBM transpose

    vmem_cap = _vmem_capacity_bytes()
    budget = (vmem_cap * 2) // 5               # headroom for Mosaic scratch

    # Per-pass lane tiles: pass 1 only streams the input (+ f32 temps); pass 2
    # streams input and output, so it gets a smaller tile for the same budget.
    tn1 = _pick_lane_tile(HW, C * (2 * itemsize + 2 * 4), budget)
    tn2 = _pick_lane_tile(HW, C * (4 * itemsize + 2 * 4), budget)

    # TODO(synk): for C not a multiple of the sublane count (8 for f32 / 16 for
    # bf16) a spatially-dense (tm, 128) per-channel layout with scalars in SMEM
    # would use vregs fully; channel-on-sublane is kept here for simplicity.

    # ---------------- pass 1: per-(N, C) lane-wide partial sums ---------------
    ws1 = 2 * C * tn1 * itemsize + 2 * C * tn1 * 4 + 4 * C * _LANES * 4
    part_sum, part_sq = pl.pallas_call(
        functools.partial(_stats_kernel, tn=tn1, hw=HW,
                          needs_mask=(HW % tn1) != 0),
        out_shape=(jax.ShapeDtypeStruct((N, C, _LANES), f32),) * 2,
        grid_spec=pltpu.PrefetchScalarGridSpec(
            num_scalar_prefetch=0,
            grid=(N, pl.cdiv(HW, tn1)),
            in_specs=[pl.BlockSpec((1, C, tn1), lambda n, k: (n, 0, k))],
            out_specs=[pl.BlockSpec((1, C, _LANES), lambda n, k: (n, 0, 0))] * 2,
        ),
        compiler_params=pltpu.CompilerParams(
            dimension_semantics=("parallel", "arbitrary"),
            vmem_limit_bytes=_vmem_limit(ws1, vmem_cap)),
    )(x3)

    # ------ finalize ((C,)-sized, plain JAX): fold renorm into scale/shift -----
    w = weight.astype(f32)
    b = bias.astype(f32)
    rm = running_mean.astype(f32)
    rv = running_var.astype(f32)
    sum_c = part_sum.sum(axis=(0, 2))
    sq_c = part_sq.sum(axis=(0, 2))
    mean = sum_c / M
    var_b = jnp.maximum(sq_c / M - mean * mean, 0.0)                 # biased
    var_u = jnp.maximum((sq_c - M * mean * mean) / max(M - 1.0, 1.0), 0.0)
    inv_rstd = jax.lax.rsqrt(rv + eps)                               # 1/running_std
    r = jnp.sqrt(var_u + eps) * inv_rstd
    d = (mean - rm) * inv_rstd
    gamma = jnp.abs(w * r) + eps                   # in-place ABN: |gamma| + eps
    scale = gamma * jax.lax.rsqrt(var_b + eps)
    shift = (b + w * d) - mean * scale
    scale_col = scale.reshape(1, C, 1)
    shift_col = shift.reshape(1, C, 1)

    # -------- pass 2: y = leaky_relu(x * scale + shift), in place over x ------
    ws2 = 4 * C * tn2 * itemsize + 2 * C * tn2 * 4
    x_spec2 = pl.BlockSpec((1, C, tn2), lambda n, k: (n, 0, k))
    ch_spec = pl.BlockSpec((1, C, 1), lambda n, k: (0, 0, 0))
    y3 = pl.pallas_call(
        functools.partial(_norm_act_kernel, slope=float(activation_param)),
        out_shape=jax.ShapeDtypeStruct((N, C, HW), x.dtype),
        grid_spec=pltpu.PrefetchScalarGridSpec(
            num_scalar_prefetch=0,
            grid=(N, pl.cdiv(HW, tn2)),
            in_specs=[x_spec2, ch_spec, ch_spec],
            out_specs=x_spec2,
        ),
        input_output_aliases={0: 0},               # y overwrites x in HBM
        compiler_params=pltpu.CompilerParams(
            dimension_semantics=("parallel", "parallel"),
            vmem_limit_bytes=_vmem_limit(ws2, vmem_cap)),
    )(x3, scale_col, shift_col)

    return y3.reshape(N, C, H, W)


# ---------------------------------------------------------------------------
# Pure-JAX reference (mirrors the PyTorch forward) for a sanity check.
# ---------------------------------------------------------------------------
def _reference(x, weight, bias, rm, rv, eps=1e-5, slope=0.01):
    C = x.shape[1]
    xt = jnp.transpose(x, (1, 0, 2, 3)).reshape(C, -1)
    mean = xt.mean(axis=1)
    var_u = xt.var(axis=1, ddof=1)
    var_b = xt.var(axis=1)
    rstd = jnp.sqrt(rv + eps)
    r = jnp.sqrt(var_u + eps) / rstd
    d = (mean - rm) / rstd
    w_eff = weight * r
    b_eff = bias + weight * d
    gamma = jnp.abs(w_eff) + eps
    bc = lambda v: v[None, :, None, None]
    y = (x - bc(mean)) / jnp.sqrt(bc(var_b) + eps) * bc(gamma) + bc(b_eff)
    return jnp.where(y >= 0.0, y, slope * y)


if __name__ == "__main__":
    N, C, H, W = 2, 4, 16, 16
    key = jax.random.PRNGKey(0)
    x = jax.random.normal(key, (N, C, H, W), dtype=jnp.float32) * 1.5 + 0.3

    # Deterministic parameter init, matching ABR.reset_parameters():
    weight = jnp.ones((C,), jnp.float32)
    bias = jnp.zeros((C,), jnp.float32)
    running_mean = jnp.zeros((C,), jnp.float32)
    running_var = jnp.ones((C,), jnp.float32)

    # Compute the reference BEFORE the kernel call: x is donated (overwritten
    # in place, matching the in-place-ABN contract).
    y_ref = jax.block_until_ready(
        _reference(x, weight, bias, running_mean, running_var))

    y = inplace_abr_forward(x, weight, bias, running_mean, running_var,
                            eps=1e-5, activation_param=0.01)
    y = jax.block_until_ready(y)

    assert y.shape == (N, C, H, W)
    assert jnp.allclose(y, y_ref, rtol=1e-4, atol=1e-4), "mismatch vs reference"

    print("KERNEL_OK")
</pallas_src>

<mosaic_0001>
module attributes {stable_mosaic.version = 11 : i64} {
  func.func @_stats_kernel(%arg0: i32, %arg1: i32, %arg2: memref<1x4x256xf32, #tpu.memory_space<vmem>>, %arg3: memref<1x4x128xf32, #tpu.memory_space<vmem>>, %arg4: memref<1x4x128xf32, #tpu.memory_space<vmem>>) attributes {dimension_semantics = [#tpu.dimension_semantics<parallel>, #tpu.dimension_semantics<arbitrary>], iteration_bounds = array<i64: 2, 1>, scalar_prefetch = 0 : i64, scratch_operands = 0 : i64, tpu.core_type = #tpu.core_type<tc>, window_params = [{transform_indices = @transform_0, window_bounds = array<i64: 1, 4, 256>}, {transform_indices = @transform_1, window_bounds = array<i64: 1, 4, 128>}, {transform_indices = @transform_2, window_bounds = array<i64: 1, 4, 128>}]} {
    %c0_i32 = arith.constant 0 : i32
    %0 = arith.cmpi eq, %arg1, %c0_i32 : i32
    %1 = arith.extui %0 : i1 to i32
    %c0_i32_0 = arith.constant 0 : i32
    %2 = arith.cmpi ne, %1, %c0_i32_0 : i32
    scf.if %2 {
      %cst_18 = arith.constant 0.000000e+00 : f32
      %19 = vector.broadcast %cst_18 : f32 to vector<1x4x128xf32>
      %c0_19 = arith.constant 0 : index
      %c0_20 = arith.constant 0 : index
      %c0_21 = arith.constant 0 : index
      %20 = vector.load %arg3[%c0_19, %c0_20, %c0_21] : memref<1x4x128xf32, #tpu.memory_space<vmem>>, vector<1x4x128xf32>
      tpu.vector_store %arg3[%c0_19, %c0_20, %c0_21], %19 {strides = array<i32>} : memref<1x4x128xf32, #tpu.memory_space<vmem>>, vector<1x4x128xf32>,
      %cst_22 = arith.constant 0.000000e+00 : f32
      %21 = vector.broadcast %cst_22 : f32 to vector<1x4x128xf32>
      %c0_23 = arith.constant 0 : index
      %c0_24 = arith.constant 0 : index
      %c0_25 = arith.constant 0 : index
      %22 = vector.load %arg4[%c0_23, %c0_24, %c0_25] : memref<1x4x128xf32, #tpu.memory_space<vmem>>, vector<1x4x128xf32>
      tpu.vector_store %arg4[%c0_23, %c0_24, %c0_25], %21 {strides = array<i32>} : memref<1x4x128xf32, #tpu.memory_space<vmem>>, vector<1x4x128xf32>,
    } else {
    }
    %cst = arith.constant 0.000000e+00 : f32
    %3 = vector.broadcast %cst : f32 to vector<1x4x128xf32>
    %cst_1 = arith.constant 0.000000e+00 : f32
    %4 = vector.broadcast %cst_1 : f32 to vector<1x4x128xf32>
    %c0 = arith.constant 0 : index
    %c0_2 = arith.constant 0 : index
    %c0_3 = arith.constant 0 : index
    %5 = vector.load %arg2[%c0, %c0_2, %c0_3] : memref<1x4x256xf32, #tpu.memory_space<vmem>>, vector<1x4x128xf32>
    %6 = arith.addf %3, %5 : vector<1x4x128xf32>
    %7 = arith.mulf %5, %5 : vector<1x4x128xf32>
    %8 = arith.addf %4, %7 : vector<1x4x128xf32>
    %c0_4 = arith.constant 0 : index
    %c0_5 = arith.constant 0 : index
    %c128 = arith.constant 128 : index
    %9 = vector.load %arg2[%c0_4, %c0_5, %c128] : memref<1x4x256xf32, #tpu.memory_space<vmem>>, vector<1x4x128xf32>
    %10 = arith.addf %6, %9 : vector<1x4x128xf32>
    %11 = arith.mulf %9, %9 : vector<1x4x128xf32>
    %12 = arith.addf %8, %11 : vector<1x4x128xf32>
    %c0_6 = arith.constant 0 : index
    %c0_7 = arith.constant 0 : index
    %c0_8 = arith.constant 0 : index
    %13 = vector.load %arg3[%c0_6, %c0_7, %c0_8] : memref<1x4x128xf32, #tpu.memory_space<vmem>>, vector<1x4x128xf32>
    %14 = arith.addf %13, %10 : vector<1x4x128xf32>
    %c0_9 = arith.constant 0 : index
    %c0_10 = arith.constant 0 : index
    %c0_11 = arith.constant 0 : index
    %15 = vector.load %arg3[%c0_9, %c0_10, %c0_11] : memref<1x4x128xf32, #tpu.memory_space<vmem>>, vector<1x4x128xf32>
    tpu.vector_store %arg3[%c0_9, %c0_10, %c0_11], %14 {strides = array<i32>} : memref<1x4x128xf32, #tpu.memory_space<vmem>>, vector<1x4x128xf32>,
    %c0_12 = arith.constant 0 : index
    %c0_13 = arith.constant 0 : index
    %c0_14 = arith.constant 0 : index
    %16 = vector.load %arg4[%c0_12, %c0_13, %c0_14] : memref<1x4x128xf32, #tpu.memory_space<vmem>>, vector<1x4x128xf32>
    %17 = arith.addf %16, %12 : vector<1x4x128xf32>
    %c0_15 = arith.constant 0 : index
    %c0_16 = arith.constant 0 : index
    %c0_17 = arith.constant 0 : index
    %18 = vector.load %arg4[%c0_15, %c0_16, %c0_17] : memref<1x4x128xf32, #tpu.memory_space<vmem>>, vector<1x4x128xf32>
    tpu.vector_store %arg4[%c0_15, %c0_16, %c0_17], %17 {strides = array<i32>} : memref<1x4x128xf32, #tpu.memory_space<vmem>>, vector<1x4x128xf32>,
    return
  }
  func.func @transform_0(%arg0: i32, %arg1: i32) -> (i32, i32, i32) {
    %c0_i32 = arith.constant 0 : i32
    %c0_i32_0 = arith.constant 0 : i32
    return %arg0, %c0_i32, %arg1 : i32, i32, i32
  }
  func.func @transform_1(%arg0: i32, %arg1: i32) -> (i32, i32, i32) {
    %c0_i32 = arith.constant 0 : i32
    %c0_i32_0 = arith.constant 0 : i32
    %c0_i32_1 = arith.constant 0 : i32
    return %arg0, %c0_i32, %c0_i32_0 : i32, i32, i32
  }
  func.func @transform_2(%arg0: i32, %arg1: i32) -> (i32, i32, i32) {
    %c0_i32 = arith.constant 0 : i32
    %c0_i32_0 = arith.constant 0 : i32
    %c0_i32_1 = arith.constant 0 : i32
    return %arg0, %c0_i32, %c0_i32_0 : i32, i32, i32
  }
}

module attributes {stable_mosaic.version = 11 : i64} {
  func.func @_norm_act_kernel(%arg0: i32, %arg1: i32, %arg2: memref<1x4x256xf32, #tpu.memory_space<vmem>>, %arg3: memref<1x4x1xf32, #tpu.memory_space<vmem>>, %arg4: memref<1x4x1xf32, #tpu.memory_space<vmem>>, %arg5: memref<1x4x256xf32, #tpu.memory_space<vmem>>) attributes {dimension_semantics = [#tpu.dimension_semantics<parallel>, #tpu.dimension_semantics<parallel>], iteration_bounds = array<i64: 2, 1>, scalar_prefetch = 0 : i64, scratch_operands = 0 : i64, tpu.core_type = #tpu.core_type<tc>, window_params = [{transform_indices = @transform_0, window_bounds = array<i64: 1, 4, 256>}, {pipeline_mode = #tpu.pipeline_mode<synchronous>, transform_indices = @transform_1, window_bounds = array<i64: 1, 4, 1>}, {pipeline_mode = #tpu.pipeline_mode<synchronous>, transform_indices = @transform_2, window_bounds = array<i64: 1, 4, 1>}, {transform_indices = @transform_3, window_bounds = array<i64: 1, 4, 256>}]} {
    %c0 = arith.constant 0 : index
    %c0_0 = arith.constant 0 : index
    %c0_1 = arith.constant 0 : index
    %0 = vector.load %arg2[%c0, %c0_0, %c0_1] : memref<1x4x256xf32, #tpu.memory_space<vmem>>, vector<1x4x256xf32>
    %c0_2 = arith.constant 0 : index
    %c0_3 = arith.constant 0 : index
    %c0_4 = arith.constant 0 : index
    %1 = vector.load %arg3[%c0_2, %c0_3, %c0_4] : memref<1x4x1xf32, #tpu.memory_space<vmem>>, vector<1x4x1xf32>
    %2 = vector.broadcast %1 : vector<1x4x1xf32> to vector<1x4x256xf32>
    %3 = arith.mulf %0, %2 : vector<1x4x256xf32>
    %c0_5 = arith.constant 0 : index
    %c0_6 = arith.constant 0 : index
    %c0_7 = arith.constant 0 : index
    %4 = vector.load %arg4[%c0_5, %c0_6, %c0_7] : memref<1x4x1xf32, #tpu.memory_space<vmem>>, vector<1x4x1xf32>
    %5 = vector.broadcast %4 : vector<1x4x1xf32> to vector<1x4x256xf32>
    %6 = arith.addf %3, %5 : vector<1x4x256xf32>
    %cst = arith.constant 0.000000e+00 : f32
    %7 = vector.broadcast %cst : f32 to vector<1x4x256xf32>
    %8 = arith.cmpf oge, %6, %7 : vector<1x4x256xf32>
    %cst_8 = arith.constant 0.00999999977 : f32
    %9 = vector.broadcast %cst_8 : f32 to vector<1x4x256xf32>
    %10 = arith.mulf %9, %6 : vector<1x4x256xf32>
    %11 = arith.select %8, %6, %10 : vector<1x4x256xi1>, vector<1x4x256xf32>
    %c0_9 = arith.constant 0 : index
    %c0_10 = arith.constant 0 : index
    %c0_11 = arith.constant 0 : index
    %12 = vector.load %arg5[%c0_9, %c0_10, %c0_11] : memref<1x4x256xf32, #tpu.memory_space<vmem>>, vector<1x4x256xf32>
    tpu.vector_store %arg5[%c0_9, %c0_10, %c0_11], %11 {strides = array<i32>} : memref<1x4x256xf32, #tpu.memory_space<vmem>>, vector<1x4x256xf32>,
    return
  }
  func.func @transform_0(%arg0: i32, %arg1: i32) -> (i32, i32, i32) {
    %c0_i32 = arith.constant 0 : i32
    %c0_i32_0 = arith.constant 0 : i32
    return %arg0, %c0_i32, %arg1 : i32, i32, i32
  }
  func.func @transform_1(%arg0: i32, %arg1: i32) -> (i32, i32, i32) {
    %c0_i32 = arith.constant 0 : i32
    %c0_i32_0 = arith.constant 0 : i32
    %c0_i32_1 = arith.constant 0 : i32
    %c0_i32_2 = arith.constant 0 : i32
    return %c0_i32, %c0_i32_0, %c0_i32_1 : i32, i32, i32
  }
  func.func @transform_2(%arg0: i32, %arg1: i32) -> (i32, i32, i32) {
    %c0_i32 = arith.constant 0 : i32
    %c0_i32_0 = arith.constant 0 : i32
    %c0_i32_1 = arith.constant 0 : i32
    %c0_i32_2 = arith.constant 0 : i32
    return %c0_i32, %c0_i32_0, %c0_i32_1 : i32, i32, i32
  }
  func.func @transform_3(%arg0: i32, %arg1: i32) -> (i32, i32, i32) {
    %c0_i32 = arith.constant 0 : i32
    %c0_i32_0 = arith.constant 0 : i32
    return %arg0, %c0_i32, %arg1 : i32, i32, i32
  }
}

</mosaic_0001>

<llo_original>
// kernel: inplace_abr_forward.2
$region0: #{inplace_abr_forward.2}
  #allocation0 [shape = 'u32[]', space=smem, size = 0x4, offset = 0x4, fixed_abs, tag = 'smem constant byte address 0x4 - core index']
  #allocation1 [shape = 'u32[72,128]{1,0:T(1,128)}', space=vmem, size = 0x9000, scoped, tag = 'internal scratch']
  %s0 = inlined_call_operand.vmem [shape: f32[2,4,256], index: 0, kind: input, shape index: {}]
  %s1 = inlined_call_operand.vmem [shape: f32[2,4,128], index: 1, kind: output, shape index: {0}]
  %s2 = inlined_call_operand.vmem [shape: f32[2,4,128], index: 2, kind: output, shape index: {1}]
  %3 = xla_tuple %s1, %s2
  %s4 = sld [smem:[#allocation0]]
  $region49: #{inplace_abr_forward.2} parent=0
    _
  %s6 = ssub.s32 1, %s4
  %s7 = scalar_select 0, %s6, %s4
  loop: start=0, step=1, limit=4
  $region2: #{inplace_abr_forward.2} parent=0 // loop_pre_header
    _
  $region3: #{inplace_abr_forward.2} parent=0 // loop_header
    %s9 = sphi 0, %s13
    %p10 = scmp.ge.s32.totalorder %s9, 4
    %s16 = sphi 0, %s28
    %s17 = sphi 0, %s24
    %s18 = sphi 0, %s16
    %s19 = sphi 0, %s17
    %s20 = sphi 0, %s18
    %s21 = sphi 0, %s19
    %s33 = sphi 0, %s35
    %s36 = sphi 0, %s33
    %s37 = sphi 0, %s36
    %s53 = sphi 0, %s37
    %s59 = sphi 0, %s61
    %s62 = sphi 0, %s59
    %s63 = sphi 0, %s62
    %s79 = sphi 0, %s63
    %s85 = sphi 0, %s87
    %s88 = sphi 0, %s85
    %s89 = sphi 0, %s88
    %s105 = sphi 0, %s89
  $region4: #{inplace_abr_forward.2} parent=0 // loop_header_branch
    %12 = sbr.rel (%p10) target = $region8
  $region5: #{inplace_abr_forward.2} parent=0 // loop_body
    %s14 = ssub.s32 %s9, 1
    %s15 = ssub.s32 %s9, 2
    %s22 = sadd.s32 1, %s17
    %p23 = scmp.ge.s32.totalorder %s22, 1
    %s24 = scalar_select %p23, 0, %s22
    %s25 = sadd.s32 1, %s16
    %s26 = scalar_select %p23, %s25, %s16
    %p27 = scmp.ge.s32.totalorder %s26, 2
    %s28 = scalar_select %p27, 0, %s26
    %s29 = ssub.s32 %s16, %s28
    %s30 = ssub.s32 %s17, %s24
    %s31 = sor.u32 %s29, %s30
    %p32 = scmp.eq.s32.totalorder %s31, 0
    %s34 = sadd.s32 %s33, 1
    %s35 = scalar_select %p32, %s33, %s34
    %p38 = pneg %p32
    %p39 = scmp.eq.s32.totalorder %s9, 1
    %p40 = por %p38, %p39
    %p41 = scmp.ne.s32.totalorder %s33, %s36
    %p42 = scmp.eq.s32.totalorder %s9, 0
    %p43 = por %p41, %p42
    %p44 = scmp.ne.s32.totalorder %s33, %s36
    %p45 = scmp.eq.s32.totalorder %s14, 1
    %p46 = por %p44, %p45
    %p47 = scmp.ne.s32.totalorder %s36, %s37
    %p48 = scmp.eq.s32.totalorder %s14, 0
    %p49 = por %p47, %p48
    %p50 = scmp.ne.s32.totalorder %s36, %s37
    %p51 = scmp.eq.s32.totalorder %s15, 1
    %p52 = por %p50, %p51
    %p54 = scmp.ne.s32.totalorder %s37, %s53
    %p55 = scmp.eq.s32.totalorder %s15, 0
    %p56 = por %p54, %p55
    %s57 = ssub.s32 %s16, %s28
    %p58 = scmp.eq.s32.totalorder %s57, 0
    %s60 = sadd.s32 %s59, 1
    %s61 = scalar_select %p58, %s59, %s60
    %p64 = pneg %p58
    %p65 = scmp.eq.s32.totalorder %s9, 1
    %p66 = por %p64, %p65
    %p67 = scmp.ne.s32.totalorder %s59, %s62
    %p68 = scmp.eq.s32.totalorder %s9, 0
    %p69 = por %p67, %p68
    %p70 = scmp.ne.s32.totalorder %s59, %s62
    %p71 = scmp.eq.s32.totalorder %s14, 1
    %p72 = por %p70, %p71
    %p73 = scmp.ne.s32.totalorder %s62, %s63
    %p74 = scmp.eq.s32.totalorder %s14, 0
    %p75 = por %p73, %p74
    %p76 = scmp.ne.s32.totalorder %s62, %s63
    %p77 = scmp.eq.s32.totalorder %s15, 1
    %p78 = por %p76, %p77
    %p80 = scmp.ne.s32.totalorder %s63, %s79
    %p81 = scmp.eq.s32.totalorder %s15, 0
    %p82 = por %p80, %p81
    %s83 = ssub.s32 %s16, %s28
    %p84 = scmp.eq.s32.totalorder %s83, 0
    %s86 = sadd.s32 %s85, 1
    %s87 = scalar_select %p84, %s85, %s86
    %p90 = pneg %p84
    %p91 = scmp.eq.s32.totalorder %s9, 1
    %p92 = por %p90, %p91
    %p93 = scmp.ne.s32.totalorder %s85, %s88
    %p94 = scmp.eq.s32.totalorder %s9, 0
    %p95 = por %p93, %p94
    %p96 = scmp.ne.s32.totalorder %s85, %s88
    %p97 = scmp.eq.s32.totalorder %s14, 1
    %p98 = por %p96, %p97
    %p99 = scmp.ne.s32.totalorder %s88, %s89
    %p100 = scmp.eq.s32.totalorder %s14, 0
    %p101 = por %p99, %p100
    %p102 = scmp.ne.s32.totalorder %s88, %s89
    %p103 = scmp.eq.s32.totalorder %s15, 1
    %p104 = por %p102, %p103
    %p106 = scmp.ne.s32.totalorder %s89, %s105
    %p107 = scmp.eq.s32.totalorder %s15, 0
    %p108 = por %p106, %p107
    %p109 = scmp.le.s32.totalorder 1, %s9
    %p110 = scmp.lt.s32.totalorder %s9, 3
    %p111 = pnand %p109, %p110
    %p112 = pneg %p111
    // Predicated region
    $region9: #{inplace_abr_forward.2} parent=5 // pred_check
      _
    $region10: #{inplace_abr_forward.2} parent=5 // pred_check_branch
      %114 = sbr.rel (%p111) target = $region12
    $region11: #{inplace_abr_forward.2} parent=5 // pred_region
      %s115 = ssub.s32 %s9, 1
    $region12: #{inplace_abr_forward.2} parent=5 // pred_fallthru
      _
    %p116 = scmp.lt.s32.totalorder %s9, 2
    // Predicated region
    $region13: #{inplace_abr_forward.2} parent=5 // pred_check
      %p117 = pneg %p116
    $region14: #{inplace_abr_forward.2} parent=5 // pred_check_branch
      %119 = sbr.rel (%p117) target = $region16
    $region15: #{inplace_abr_forward.2} parent=5 // pred_region
      // Predicated region
      $region17: #{inplace_abr_forward.2} parent=15 // pred_check
        %p120 = pneg %p43
      $region18: #{inplace_abr_forward.2} parent=15 // pred_check_branch
        %122 = sbr.rel (%p120) target = $region20
      $region19: #{inplace_abr_forward.2} parent=15 // pred_region
        %s123 = smul.u32 2, %s17
        %p124 = scmp.lt.s32.totalorder %s16, 1
        %s125 = scalar_select %p124, %s16, 1
        %p126 = scmp.lt.s32.totalorder %s123, 1
        %s127 = scalar_select %p126, %s123, 1
        %s128 = smul.addr %s125, 2
        %s129 = sadd.s32 %s127, %s128
        %s130 = smul.addr %s129, 4
        %s131 = scalar_lea.vmem %s0, %s130
        %s132 = smul.u32 2, %s17
      $region20: #{inplace_abr_forward.2} parent=15 // pred_fallthru
        _
    $region16: #{inplace_abr_forward.2} parent=5 // pred_fallthru
      _
    %p133 = scmp.le.s32.totalorder 1, %s9
    %p134 = scmp.lt.s32.totalorder %s9, 3
    %p135 = pnand %p133, %p134
    %p136 = pneg %p135
    // Predicated region
    $region21: #{inplace_abr_forward.2} parent=5 // pred_check
      _
    $region22: #{inplace_abr_forward.2} parent=5 // pred_check_branch
      %138 = sbr.rel (%p135) target = $region24
    $region23: #{inplace_abr_forward.2} parent=5 // pred_region
      %s139 = ssub.s32 %s9, 1
      %s140 = smul.u32 2, %s19
      %p141 = scmp.lt.s32.totalorder %s18, 1
      %s142 = scalar_select %p141, %s18, 1
      %p143 = scmp.lt.s32.totalorder %s140, 1
      %s144 = scalar_select %p143, %s140, 1
      %s145 = smul.addr %s142, 2
      %s146 = sadd.s32 %s144, %s145
      %s147 = smul.addr %s146, 4
      %s148 = scalar_lea.vmem %s0, %s147
      %p149 = pneg %p49
      %p150 = pneg %p46
      %p151 = pneg %p75
      %p152 = pneg %p72
      %p153 = scmp.lt.s32.totalorder %s18, 1
      %s154 = scalar_select %p153, %s18, 1
      %s155 = smul.addr %s154, 4
      %s156 = scalar_lea.vmem %s1, %s155
      %p157 = pneg %p101
      %p158 = pneg %p98
      %p159 = scmp.lt.s32.totalorder %s18, 1
      %s160 = scalar_select %p159, %s18, 1
      %s161 = smul.addr %s160, 4
      %s162 = scalar_lea.vmem %s2, %s161
      %s163 = smul.u32 2, %s19
      %p164 = scmp.lt.s32.totalorder %s18, 1
      %s165 = scalar_select %p164, %s18, 1
      %p166 = scmp.lt.s32.totalorder %s163, 1
      %s167 = scalar_select %p166, %s163, 1
      %s168 = smul.addr %s165, 2
      %s169 = sadd.s32 %s167, %s168
      %s170 = smul.addr %s169, 4
      %s171 = scalar_lea.vmem %s0, %s170
      %s172 = smul.u32 2, %s19
      %p173 = scmp.lt.s32.totalorder %s18, 1
      %s174 = scalar_select %p173, %s18, 1
      %s175 = smul.addr %s174, 4
      %s176 = scalar_lea.vmem %s1, %s175
      %p177 = scmp.lt.s32.totalorder %s18, 1
      %s178 = scalar_select %p177, %s18, 1
      %s179 = smul.addr %s178, 4
      %s180 = scalar_lea.vmem %s2, %s179
      %p181 = scmp.eq.s32.totalorder %s19, 0
      // Predicated region
      $region25: #{inplace_abr_forward.2} parent=23 // pred_check
        %p182 = pneg %p181
      $region26: #{inplace_abr_forward.2} parent=23 // pred_check_branch
        %184 = sbr.rel (%p182) target = $region28
      $region27: #{inplace_abr_forward.2} parent=23 // pred_region
        %185 = vst [vmem:[%s176] sm:$0xf] 0.0
        %186 = vst [vmem:[%s180] sm:$0xf] 0.0
      $region28: #{inplace_abr_forward.2} parent=23 // pred_fallthru
        _
      %v187 = vld [vmem:[%s171] sm:$0xf]
      %v188 = vadd.f32 %v187, 0.0
      %v189 = vmul.f32 %v187, %v187
      %v190 = vadd.f32 %v189, 0.0
      %v191 = vld [vmem:[%s171 + $0x4] sm:$0xf]
      %v192 = vadd.f32 %v188, %v191
      %v193 = vmul.f32 %v191, %v191
      %v194 = vadd.f32 %v190, %v193
      %v195 = vld [vmem:[%s176] sm:$0xf]
      %v196 = vadd.f32 %v195, %v192
      %197 = vst [vmem:[%s176] sm:$0xf] %v196
      %v198 = vld [vmem:[%s180] sm:$0xf]
      %v199 = vadd.f32 %v198, %v194
      %200 = vst [vmem:[%s180] sm:$0xf] %v199
      %p201 = scmp.lt.s32.totalorder %s18, 1
      %s202 = scalar_select %p201, %s18, 1
      %s203 = smul.addr %s202, 4
      %s204 = scalar_lea.vmem %s1, %s203
      %p205 = scmp.lt.s32.totalorder %s18, 1
      %s206 = scalar_select %p205, %s18, 1
      %s207 = smul.addr %s206, 4
      %s208 = scalar_lea.vmem %s2, %s207
      // Predicated region
      $region29: #{inplace_abr_forward.2} parent=23 // pred_check
        %p209 = pneg %p72
      $region30: #{inplace_abr_forward.2} parent=23 // pred_check_branch
        %211 = sbr.rel (%p209) target = $region32
      $region31: #{inplace_abr_forward.2} parent=23 // pred_region
        _
      $region32: #{inplace_abr_forward.2} parent=23 // pred_fallthru
        _
      // Predicated region
      $region33: #{inplace_abr_forward.2} parent=23 // pred_check
        %p212 = pneg %p98
      $region34: #{inplace_abr_forward.2} parent=23 // pred_check_branch
        %214 = sbr.rel (%p212) target = $region36
      $region35: #{inplace_abr_forward.2} parent=23 // pred_region
        _
      $region36: #{inplace_abr_forward.2} parent=23 // pred_fallthru
        _
    $region24: #{inplace_abr_forward.2} parent=5 // pred_fallthru
      _
    %p215 = scmp.le.s32.totalorder 2, %s9
    // Predicated region
    $region37: #{inplace_abr_forward.2} parent=5 // pred_check
      %p216 = pneg %p215
    $region38: #{inplace_abr_forward.2} parent=5 // pred_check_branch
      %218 = sbr.rel (%p216) target = $region40
    $region39: #{inplace_abr_forward.2} parent=5 // pred_region
      %s219 = ssub.s32 %s9, 2
      // Predicated region
      $region41: #{inplace_abr_forward.2} parent=39 // pred_check
        %p220 = pneg %p78
      $region42: #{inplace_abr_forward.2} parent=39 // pred_check_branch
        %222 = sbr.rel (%p220) target = $region44
      $region43: #{inplace_abr_forward.2} parent=39 // pred_region
        %p223 = scmp.lt.s32.totalorder %s20, 1
        %s224 = scalar_select %p223, %s20, 1
        %s225 = smul.addr %s224, 4
        %s226 = scalar_lea.vmem %s1, %s225
      $region44: #{inplace_abr_forward.2} parent=39 // pred_fallthru
        _
      // Predicated region
      $region45: #{inplace_abr_forward.2} parent=39 // pred_check
        %p227 = pneg %p104
      $region46: #{inplace_abr_forward.2} parent=39 // pred_check_branch
        %229 = sbr.rel (%p227) target = $region48
      $region47: #{inplace_abr_forward.2} parent=39 // pred_region
        %p230 = scmp.lt.s32.totalorder %s20, 1
        %s231 = scalar_select %p230, %s20, 1
        %s232 = smul.addr %s231, 4
        %s233 = scalar_lea.vmem %s2, %s232
      $region48: #{inplace_abr_forward.2} parent=39 // pred_fallthru
        _
    $region40: #{inplace_abr_forward.2} parent=5 // pred_fallthru
      _
  $region6: #{inplace_abr_forward.2} parent=0 // loop_footer
    %s13 = sadd.s32 1, %s9
  $region7: #{inplace_abr_forward.2} parent=0 // loop_footer_branch
    %8 = sbr.rel target = $region3
  $region8: #{inplace_abr_forward.2} parent=0 // loop_exit
    _

// kernel: inplace_abr_forward.3
$region0: #{inplace_abr_forward.3}
  #allocation0 [shape = 'u32[]', space=smem, size = 0x4, offset = 0x4, fixed_abs, tag = 'smem constant byte address 0x4 - core index']
  #allocation1 [shape = 'u32[72,128]{1,0:T(1,128)}', space=vmem, size = 0x9000, scoped, tag = 'internal scratch']
  %s0 = inlined_call_operand.vmem [shape: f32[2,4,256], index: 0, kind: input, shape index: {}, may-alias: {0,3}]
  %s1 = inlined_call_operand.vmem [shape: f32[1,4,1], index: 1, kind: input, shape index: {}]
  %s2 = inlined_call_operand.vmem [shape: f32[1,4,1], index: 2, kind: input, shape index: {}]
  %s3 = inlined_call_operand.vmem [shape: f32[2,4,256], index: 3, kind: output, shape index: {}, may-alias: {0,3}]
  %s4 = sld [smem:[#allocation0]]
  $region45: #{inplace_abr_forward.3} parent=0
    _
  %s6 = ssub.s32 1, %s4
  %s7 = scalar_select 0, %s6, %s4
  loop: start=0, step=1, limit=4
  $region2: #{inplace_abr_forward.3} parent=0 // loop_pre_header
    _
  $region3: #{inplace_abr_forward.3} parent=0 // loop_header
    %s9 = sphi 0, %s13
    %p10 = scmp.ge.s32.totalorder %s9, 4
    %s16 = sphi 0, %s28
    %s17 = sphi 0, %s24
    %s18 = sphi 0, %s16
    %s19 = sphi 0, %s17
    %s20 = sphi 0, %s18
    %s21 = sphi 0, %s19
    %s33 = sphi 0, %s35
    %s36 = sphi 0, %s33
    %s37 = sphi 0, %s36
    %s53 = sphi 0, %s37
    %s57 = sphi 0, %s57
    %s59 = sphi 0, %s57
    %s60 = sphi 0, %s59
    %s74 = sphi 0, %s60
    %s78 = sphi 0, %s78
    %s80 = sphi 0, %s78
    %s81 = sphi 0, %s80
    %s95 = sphi 0, %s81
    %s103 = sphi 0, %s105
    %s106 = sphi 0, %s103
    %s107 = sphi 0, %s106
    %s123 = sphi 0, %s107
  $region4: #{inplace_abr_forward.3} parent=0 // loop_header_branch
    %12 = sbr.rel (%p10) target = $region8
  $region5: #{inplace_abr_forward.3} parent=0 // loop_body
    %s14 = ssub.s32 %s9, 1
    %s15 = ssub.s32 %s9, 2
    %s22 = sadd.s32 1, %s17
    %p23 = scmp.ge.s32.totalorder %s22, 1
    %s24 = scalar_select %p23, 0, %s22
    %s25 = sadd.s32 1, %s16
    %s26 = scalar_select %p23, %s25, %s16
    %p27 = scmp.ge.s32.totalorder %s26, 2
    %s28 = scalar_select %p27, 0, %s26
    %s29 = ssub.s32 %s16, %s28
    %s30 = ssub.s32 %s17, %s24
    %s31 = sor.u32 %s29, %s30
    %p32 = scmp.eq.s32.totalorder %s31, 0
    %s34 = sadd.s32 %s33, 1
    %s35 = scalar_select %p32, %s33, %s34
    %p38 = pneg %p32
    %p39 = scmp.eq.s32.totalorder %s9, 1
    %p40 = por %p38, %p39
    %p41 = scmp.ne.s32.totalorder %s33, %s36
    %p42 = scmp.eq.s32.totalorder %s9, 0
    %p43 = por %p41, %p42
    %p44 = scmp.ne.s32.totalorder %s33, %s36
    %p45 = scmp.eq.s32.totalorder %s14, 1
    %p46 = por %p44, %p45
    %p47 = scmp.ne.s32.totalorder %s36, %s37
    %p48 = scmp.eq.s32.totalorder %s14, 0
    %p49 = por %p47, %p48
    %p50 = scmp.ne.s32.totalorder %s36, %s37
    %p51 = scmp.eq.s32.totalorder %s15, 1
    %p52 = por %p50, %p51
    %p54 = scmp.ne.s32.totalorder %s37, %s53
    %p55 = scmp.eq.s32.totalorder %s15, 0
    %p56 = por %p54, %p55
    %s58 = sadd.s32 %s57, 1
    %p61 = scmp.eq.s32.totalorder %s9, 1
    %p62 = scmp.ne.s32.totalorder %s57, %s59
    %p63 = scmp.eq.s32.totalorder %s9, 0
    %p64 = por %p62, %p63
    %p65 = scmp.ne.s32.totalorder %s57, %s59
    %p66 = scmp.eq.s32.totalorder %s14, 1
    %p67 = por %p65, %p66
    %p68 = scmp.ne.s32.totalorder %s59, %s60
    %p69 = scmp.eq.s32.totalorder %s14, 0
    %p70 = por %p68, %p69
    %p71 = scmp.ne.s32.totalorder %s59, %s60
    %p72 = scmp.eq.s32.totalorder %s15, 1
    %p73 = por %p71, %p72
    %p75 = scmp.ne.s32.totalorder %s60, %s74
    %p76 = scmp.eq.s32.totalorder %s15, 0
    %p77 = por %p75, %p76
    %s79 = sadd.s32 %s78, 1
    %p82 = scmp.eq.s32.totalorder %s9, 1
    %p83 = scmp.ne.s32.totalorder %s78, %s80
    %p84 = scmp.eq.s32.totalorder %s9, 0
    %p85 = por %p83, %p84
    %p86 = scmp.ne.s32.totalorder %s78, %s80
    %p87 = scmp.eq.s32.totalorder %s14, 1
    %p88 = por %p86, %p87
    %p89 = scmp.ne.s32.totalorder %s80, %s81
    %p90 = scmp.eq.s32.totalorder %s14, 0
    %p91 = por %p89, %p90
    %p92 = scmp.ne.s32.totalorder %s80, %s81
    %p93 = scmp.eq.s32.totalorder %s15, 1
    %p94 = por %p92, %p93
    %p96 = scmp.ne.s32.totalorder %s81, %s95
    %p97 = scmp.eq.s32.totalorder %s15, 0
    %p98 = por %p96, %p97
    %s99 = ssub.s32 %s16, %s28
    %s100 = ssub.s32 %s17, %s24
    %s101 = sor.u32 %s99, %s100
    %p102 = scmp.eq.s32.totalorder %s101, 0
    %s104 = sadd.s32 %s103, 1
    %s105 = scalar_select %p102, %s103, %s104
    %p108 = pneg %p102
    %p109 = scmp.eq.s32.totalorder %s9, 1
    %p110 = por %p108, %p109
    %p111 = scmp.ne.s32.totalorder %s103, %s106
    %p112 = scmp.eq.s32.totalorder %s9, 0
    %p113 = por %p111, %p112
    %p114 = scmp.ne.s32.totalorder %s103, %s106
    %p115 = scmp.eq.s32.totalorder %s14, 1
    %p116 = por %p114, %p115
    %p117 = scmp.ne.s32.totalorder %s106, %s107
    %p118 = scmp.eq.s32.totalorder %s14, 0
    %p119 = por %p117, %p118
    %p120 = scmp.ne.s32.totalorder %s106, %s107
    %p121 = scmp.eq.s32.totalorder %s15, 1
    %p122 = por %p120, %p121
    %p124 = scmp.ne.s32.totalorder %s107, %s123
    %p125 = scmp.eq.s32.totalorder %s15, 0
    %p126 = por %p124, %p125
    %p127 = scmp.le.s32.totalorder 1, %s9
    %p128 = scmp.lt.s32.totalorder %s9, 3
    %p129 = pnand %p127, %p128
    %p130 = pneg %p129
    // Predicated region
    $region9: #{inplace_abr_forward.3} parent=5 // pred_check
      _
    $region10: #{inplace_abr_forward.3} parent=5 // pred_check_branch
      %132 = sbr.rel (%p129) target = $region12
    $region11: #{inplace_abr_forward.3} parent=5 // pred_region
      %s133 = ssub.s32 %s9, 1
      // Predicated region
      $region13: #{inplace_abr_forward.3} parent=11 // pred_check
        %p134 = pneg %p70
      $region14: #{inplace_abr_forward.3} parent=11 // pred_check_branch
        %136 = sbr.rel (%p134) target = $region16
      $region15: #{inplace_abr_forward.3} parent=11 // pred_region
        _
      $region16: #{inplace_abr_forward.3} parent=11 // pred_fallthru
        _
      // Predicated region
      $region17: #{inplace_abr_forward.3} parent=11 // pred_check
        %p137 = pneg %p91
      $region18: #{inplace_abr_forward.3} parent=11 // pred_check_branch
        %139 = sbr.rel (%p137) target = $region20
      $region19: #{inplace_abr_forward.3} parent=11 // pred_region
        _
      $region20: #{inplace_abr_forward.3} parent=11 // pred_fallthru
        _
    $region12: #{inplace_abr_forward.3} parent=5 // pred_fallthru
      _
    %p140 = scmp.lt.s32.totalorder %s9, 2
    // Predicated region
    $region21: #{inplace_abr_forward.3} parent=5 // pred_check
      %p141 = pneg %p140
    $region22: #{inplace_abr_forward.3} parent=5 // pred_check_branch
      %143 = sbr.rel (%p141) target = $region24
    $region23: #{inplace_abr_forward.3} parent=5 // pred_region
      // Predicated region
      $region25: #{inplace_abr_forward.3} parent=23 // pred_check
        %p144 = pneg %p43
      $region26: #{inplace_abr_forward.3} parent=23 // pred_check_branch
        %146 = sbr.rel (%p144) target = $region28
      $region27: #{inplace_abr_forward.3} parent=23 // pred_region
        %s147 = smul.u32 2, %s17
        %p148 = scmp.lt.s32.totalorder %s16, 1
        %s149 = scalar_select %p148, %s16, 1
        %p150 = scmp.lt.s32.totalorder %s147, 1
        %s151 = scalar_select %p150, %s147, 1
        %s152 = smul.addr %s149, 2
        %s153 = sadd.s32 %s151, %s152
        %s154 = smul.addr %s153, 4
        %s155 = scalar_lea.vmem %s0, %s154
        %s156 = smul.u32 2, %s17
      $region28: #{inplace_abr_forward.3} parent=23 // pred_fallthru
        _
    $region24: #{inplace_abr_forward.3} parent=5 // pred_fallthru
      _
    %p157 = scmp.le.s32.totalorder 1, %s9
    %p158 = scmp.lt.s32.totalorder %s9, 3
    %p159 = pnand %p157, %p158
    %p160 = pneg %p159
    // Predicated region
    $region29: #{inplace_abr_forward.3} parent=5 // pred_check
      _
    $region30: #{inplace_abr_forward.3} parent=5 // pred_check_branch
      %162 = sbr.rel (%p159) target = $region32
    $region31: #{inplace_abr_forward.3} parent=5 // pred_region
      %s163 = ssub.s32 %s9, 1
      %s164 = smul.u32 2, %s19
      %p165 = scmp.lt.s32.totalorder %s18, 1
      %s166 = scalar_select %p165, %s18, 1
      %p167 = scmp.lt.s32.totalorder %s164, 1
      %s168 = scalar_select %p167, %s164, 1
      %s169 = smul.addr %s166, 2
      %s170 = sadd.s32 %s168, %s169
      %s171 = smul.addr %s170, 4
      %s172 = scalar_lea.vmem %s0, %s171
      %p173 = pneg %p49
      %p174 = pneg %p46
      %p175 = pneg %p70
      %p176 = pneg %p67
      %p177 = pneg %p91
      %p178 = pneg %p88
      %p179 = pneg %p119
      %p180 = pneg %p116
      %s181 = smul.u32 2, %s19
      %p182 = scmp.lt.s32.totalorder %s18, 1
      %s183 = scalar_select %p182, %s18, 1
      %p184 = scmp.lt.s32.totalorder %s181, 1
      %s185 = scalar_select %p184, %s181, 1
      %s186 = smul.addr %s183, 2
      %s187 = sadd.s32 %s185, %s186
      %s188 = smul.addr %s187, 4
      %s189 = scalar_lea.vmem %s3, %s188
      %s190 = smul.u32 2, %s19
      %p191 = scmp.lt.s32.totalorder %s18, 1
      %s192 = scalar_select %p191, %s18, 1
      %p193 = scmp.lt.s32.totalorder %s190, 1
      %s194 = scalar_select %p193, %s190, 1
      %s195 = smul.addr %s192, 2
      %s196 = sadd.s32 %s194, %s195
      %s197 = smul.addr %s196, 4
      %s198 = scalar_lea.vmem %s0, %s197
      %s199 = smul.u32 2, %s19
      %s200 = smul.u32 2, %s19
      %p201 = scmp.lt.s32.totalorder %s18, 1
      %s202 = scalar_select %p201, %s18, 1
      %p203 = scmp.lt.s32.totalorder %s200, 1
      %s204 = scalar_select %p203, %s200, 1
      %s205 = smul.addr %s202, 2
      %s206 = sadd.s32 %s204, %s205
      %s207 = smul.addr %s206, 4
      %s208 = scalar_lea.vmem %s3, %s207
      %s209 = smul.u32 2, %s19
      %v210 = vld [vmem:[%s198] sm:$0xff]
      %v211 = vld [vmem:[%s1] sm:$0xf]
      %213 = vset.pattern.permute.xlu0 0
      %214 = vperm.xlu0 %213, %v211
      %v215 = vpop.permute.xlu0 %214
      %v217 = vunpack.c.l.s4 839922192
      %v218 = vunpack.c.0.s8 %v217
      %v219 = vperm.slane %v215, %v218
      %v221 = vmul.f32 %v210, %v219
      %v222 = vld [vmem:[%s2] sm:$0xf]
      %224 = vset.pattern.permute.xlu0 0
      %225 = vperm.xlu0 %224, %v222
      %v226 = vpop.permute.xlu0 %225
      %v228 = vunpack.c.l.s4 839922192
      %v229 = vunpack.c.0.s8 %v228
      %v230 = vperm.slane %v226, %v229
      %v232 = vadd.f32 %v221, %v230
      %vm233 = vcmp.ge.f32.partialorder %v232, 0.0
      %v234 = vmul.f32 %v232, 0.01
      %v235 = vsel %vm233, %v232, %v234
      %236 = vst [vmem:[%s208] sm:$0xff] %v235
      %s237 = smul.u32 2, %s19
      %p238 = scmp.lt.s32.totalorder %s18, 1
      %s239 = scalar_select %p238, %s18, 1
      %p240 = scmp.lt.s32.totalorder %s237, 1
      %s241 = scalar_select %p240, %s237, 1
      %s242 = smul.addr %s239, 2
      %s243 = sadd.s32 %s241, %s242
      %s244 = smul.addr %s243, 4
      %s245 = scalar_lea.vmem %s3, %s244
      // Predicated region
      $region33: #{inplace_abr_forward.3} parent=31 // pred_check
        %p246 = pneg %p116
      $region34: #{inplace_abr_forward.3} parent=31 // pred_check_branch
        %248 = sbr.rel (%p246) target = $region36
      $region35: #{inplace_abr_forward.3} parent=31 // pred_region
        %s249 = smul.u32 2, %s19
      $region36: #{inplace_abr_forward.3} parent=31 // pred_fallthru
        _
    $region32: #{inplace_abr_forward.3} parent=5 // pred_fallthru
      _
    %p250 = scmp.le.s32.totalorder 2, %s9
    // Predicated region
    $region37: #{inplace_abr_forward.3} parent=5 // pred_check
      %p251 = pneg %p250
    $region38: #{inplace_abr_forward.3} parent=5 // pred_check_branch
      %253 = sbr.rel (%p251) target = $region40
    $region39: #{inplace_abr_forward.3} parent=5 // pred_region
      %s254 = ssub.s32 %s9, 2
      // Predicated region
      $region41: #{inplace_abr_forward.3} parent=39 // pred_check
        %p255 = pneg %p122
      $region42: #{inplace_abr_forward.3} parent=39 // pred_check_branch
        %257 = sbr.rel (%p255) target = $region44
      $region43: #{inplace_abr_forward.3} parent=39 // pred_region
        %s258 = smul.u32 2, %s21
        %p259 = scmp.lt.s32.totalorder %s20, 1
        %s260 = scalar_select %p259, %s20, 1
        %p261 = scmp.lt.s32.totalorder %s258, 1
        %s262 = scalar_select %p261, %s258, 1
        %s263 = smul.addr %s260, 2
        %s264 = sadd.s32 %s262, %s263
        %s265 = smul.addr %s264, 4
        %s266 = scalar_lea.vmem %s3, %s265
      $region44: #{inplace_abr_forward.3} parent=39 // pred_fallthru
        _
    $region40: #{inplace_abr_forward.3} parent=5 // pred_fallthru
      _
  $region6: #{inplace_abr_forward.3} parent=0 // loop_footer
    %s13 = sadd.s32 1, %s9
  $region7: #{inplace_abr_forward.3} parent=0 // loop_footer_branch
    %8 = sbr.rel target = $region3
  $region8: #{inplace_abr_forward.3} parent=0 // loop_exit
    _

</llo_original>
